<compile_context>
chip_gen: v7x
topology: tpu7x:2x2x1
jax: 0.10.0
libtpu: 0.0.40
codegen_flags: <defaults>
</compile_context>

<pallas_src>
import functools
import math

import jax
import jax.numpy as jnp
from jax import lax
from jax.experimental import pallas as pl
from jax.experimental.pallas import tpu as pltpu


# --------------------------------------------------------------------------- #
# Kernel
# --------------------------------------------------------------------------- #
def aamsoftmax_kernel(x_ref, wt_ref, lbl_ref, loss_ref,
                      xn_ref, l_ref, t_ref,
                      *, cos_m, sin_m, th, mm, scale, easy_margin,
                      c_tile, num_classes, c_padded):
    c_idx = pl.program_id(1)
    n_c = pl.num_programs(1)

    # ---- once per B-tile: normalize x (scale folded in), reset accumulators --
    @pl.when(c_idx == 0)
    def _init():
        x = x_ref[...].astype(jnp.float32)
        # F.normalize: x / max(||x||, 1e-12) == x * rsqrt(max(||x||^2, 1e-24))
        inv = lax.rsqrt(jnp.maximum(jnp.sum(x * x, axis=1, keepdims=True),
                                    1e-24))
        xn_ref[...] = (x * (inv * scale)).astype(xn_ref.dtype)
        l_ref[...] = jnp.zeros(l_ref.shape, jnp.float32)
        t_ref[...] = jnp.zeros(t_ref.shape, jnp.float32)

    # ---- per C-tile: scaled logits straight off the MXU (W already unit-norm,
    #      transposed and in compute dtype) --------------------------------- --
    logits = jnp.dot(xn_ref[...], wt_ref[...],
                     preferred_element_type=jnp.float32)       # (bt, ct) f32

    bt, ct = logits.shape
    class_ids = c_idx * c_tile + lax.broadcasted_iota(jnp.int32, (bt, ct), 1)

    # Static max bound: |cosine| <= 1  =>  logits <= scale.  No online max.
    e = jnp.exp(logits - scale)
    if c_padded:                                   # mask padded classes
        e = jnp.where(class_ids < num_classes, e, 0.0)
    l_ref[...] += jnp.sum(e, axis=1, keepdims=True)

    # gather the scaled target logit (exactly one hit per row across C tiles)
    hit = class_ids == lbl_ref[...]
    t_ref[...] += jnp.sum(jnp.where(hit, logits, 0.0), axis=1, keepdims=True)

    # ---- finalize: margin math only on the (bt, 1) target column -------------
    @pl.when(c_idx == n_c - 1)
    def _finalize():
        t_logit = t_ref[...]                        # s * cos_t
        cos_t = t_logit * (1.0 / scale)
        sine_t = jnp.sqrt(jnp.clip(1.0 - cos_t * cos_t, 0.0, 1.0))
        phi_t = cos_t * cos_m - sine_t * sin_m
        if easy_margin:
            phi_t = jnp.where(cos_t > 0, phi_t, cos_t)
        else:
            phi_t = jnp.where(cos_t - th > 0, phi_t, cos_t - mm)
        phi_logit = scale * phi_t
        # Replace target's exp(s*cos_t) term by exp(s*phi_t); both exponents
        # are <= 0 (bounded by the static max).  Clamp against fp cancellation.
        l_corr = jnp.maximum(
            l_ref[...] - jnp.exp(t_logit - scale) + jnp.exp(phi_logit - scale),
            1e-30)
        lse = scale + jnp.log(l_corr)
        loss_ref[...] = lse - phi_logit             # per-row CE loss


# --------------------------------------------------------------------------- #
# Tiling / hardware helpers
# --------------------------------------------------------------------------- #
def _round_up(x, m):
    return ((x + m - 1) // m) * m


def _tile_and_pad(n, target, align, min_tiles=1):
    """Pick an `align`-aligned tile and padded extent (padded % tile == 0)."""
    target = max(int(target), align)
    n_al = _round_up(n, align)
    num = max(min_tiles, -(-n_al // target))
    tile = _round_up(-(-n_al // num), align)
    num = max(-(-n_al // tile), min_tiles)
    return tile, tile * num


def _vmem_capacity_bytes(default=64 << 20):
    try:
        info = pltpu.get_tpu_info()
        cap = getattr(info, "vmem_capacity_bytes", None)
        if isinstance(cap, int) and cap > 0:
            return cap
    except Exception:
        pass
    return default


def _num_tensorcores():
    """Best-effort TC-per-chip count (v7x = 2); safe fallback of 1."""
    try:
        info = pltpu.get_tpu_info()
        for attr in ("num_cores", "core_count", "num_tensorcores",
                     "tensorcore_count", "cores_per_chip"):
            v = getattr(info, attr, None)
            if isinstance(v, int) and v > 1:
                return v
    except Exception:
        pass
    try:
        v = getattr(jax.devices()[0], "num_cores", None)
        if isinstance(v, int) and v > 1:
            return v
    except Exception:
        pass
    return 1


# --------------------------------------------------------------------------- #
# Wrapper
# --------------------------------------------------------------------------- #
def aamsoftmax_loss(x, weight, label, *, margin=0.3, scale=15.0,
                    easy_margin=False, b_tile=256, c_tile=1024,
                    force_bf16=False):
    """x: (..., D), weight: (C, D), label: (B,) int  ->  scalar mean CE loss."""
    in_feats = weight.shape[1]
    x2d = x.reshape(-1, in_feats)
    B = x2d.shape[0]
    C = weight.shape[0]
    assert B == label.shape[0]
    assert x2d.shape[1] == in_feats

    # bf16 MXU operands when the input is bf16 (or when forced); f32 otherwise.
    if force_bf16 or x2d.dtype == jnp.bfloat16:
        compute_dtype = jnp.bfloat16
    else:
        compute_dtype = jnp.float32

    # ---- pre-normalize + transpose + cast W once in the wrapper (one XLA op) -
    w32 = weight.astype(jnp.float32)
    w_n = w32 * lax.rsqrt(
        jnp.maximum(jnp.sum(w32 * w32, axis=1, keepdims=True), 1e-24))
    w_t = w_n.T.astype(compute_dtype)                       # (D, C)

    # ---- tile selection + padding --------------------------------------------
    n_cores = _num_tensorcores()
    min_b_tiles = 2 if (n_cores >= 2 and _round_up(B, 8) >= 16) else 1
    bt, B_pad = _tile_and_pad(B, b_tile, 8, min_tiles=min_b_tiles)
    ct, C_pad = _tile_and_pad(C, c_tile, 128)
    nb, nc = B_pad // bt, C_pad // ct

    label_p = label.astype(jnp.int32)
    if B_pad != B:
        x2d = jnp.pad(x2d, ((0, B_pad - B), (0, 0)))
        label_p = jnp.pad(label_p, (0, B_pad - B))
    if C_pad != C:
        w_t = jnp.pad(w_t, ((0, 0), (0, C_pad - C)))
    label2d = label_p.reshape(-1, 1)

    # ---- VMEM budget ----------------------------------------------------------
    x_is = jnp.dtype(x2d.dtype).itemsize
    cd_is = jnp.dtype(compute_dtype).itemsize
    est = (2 * (bt * in_feats * x_is + in_feats * ct * cd_is + 2 * bt * 4)  # dbl-buffered blocks
           + bt * in_feats * cd_is + 2 * bt * 4                            # scratch
           + 5 * bt * ct * 4)                                               # live (bt, ct) temps
    vmem_cap = _vmem_capacity_bytes()
    vmem_limit = int(min(max(2 * est, 32 << 20), vmem_cap - (4 << 20)))

    cos_m = math.cos(margin)
    sin_m = math.sin(margin)
    th = math.cos(math.pi - margin)
    mm = math.sin(math.pi - margin) * margin

    kernel = functools.partial(
        aamsoftmax_kernel, cos_m=cos_m, sin_m=sin_m, th=th, mm=mm,
        scale=float(scale), easy_margin=easy_margin,
        c_tile=ct, num_classes=C, c_padded=(C_pad != C))

    per_row = pl.pallas_call(
        kernel,
        out_shape=jax.ShapeDtypeStruct((B_pad, 1), jnp.float32),
        grid_spec=pltpu.PrefetchScalarGridSpec(
            num_scalar_prefetch=0,
            grid=(nb, nc),
            in_specs=[
                pl.BlockSpec((bt, in_feats), lambda b, c: (b, 0)),   # x
                pl.BlockSpec((in_feats, ct), lambda b, c: (0, c)),   # W^T (unit-norm)
                pl.BlockSpec((bt, 1), lambda b, c: (b, 0)),          # label
            ],
            out_specs=pl.BlockSpec((bt, 1), lambda b, c: (b, 0)),
            scratch_shapes=[
                pltpu.VMEM((bt, in_feats), compute_dtype),   # s * normalized x
                pltpu.VMEM((bt, 1), jnp.float32),            # running sumexp
                pltpu.VMEM((bt, 1), jnp.float32),            # target scaled logit
            ],
        ),
        compiler_params=pltpu.CompilerParams(
            dimension_semantics=("parallel", "arbitrary"),
            vmem_limit_bytes=vmem_limit,
        ),
    )(x2d, w_t, label2d)

    return jnp.mean(per_row[:B, 0])


# --------------------------------------------------------------------------- #
# Pure-JAX reference matching the PyTorch forward
# --------------------------------------------------------------------------- #
def aamsoftmax_loss_ref(x, weight, label, *, margin=0.3, scale=15.0,
                        easy_margin=False):
    in_feats = weight.shape[1]
    x = x.reshape(-1, in_feats).astype(jnp.float32)
    cos_m, sin_m = math.cos(margin), math.sin(margin)
    th = math.cos(math.pi - margin)
    mm = math.sin(math.pi - margin) * margin
    xn = x / jnp.maximum(jnp.linalg.norm(x, axis=1, keepdims=True), 1e-12)
    wn = weight / jnp.maximum(
        jnp.linalg.norm(weight, axis=1, keepdims=True), 1e-12)
    cosine = xn @ wn.T
    sine = jnp.sqrt(jnp.clip(1.0 - cosine * cosine, 0.0, 1.0))
    phi = cosine * cos_m - sine * sin_m
    if easy_margin:
        phi = jnp.where(cosine > 0, phi, cosine)
    else:
        phi = jnp.where(cosine - th > 0, phi, cosine - mm)
    one_hot = jax.nn.one_hot(label, weight.shape[0], dtype=jnp.float32)
    output = (one_hot * phi + (1.0 - one_hot) * cosine) * scale
    logp = jax.nn.log_softmax(output, axis=1)
    return -jnp.mean(jnp.sum(one_hot * logp, axis=1))


if __name__ == "__main__":
    # Small deterministic config consistent with the module: nOut (feature dim),
    # nClasses, batch.  Exercises B/C padding + the masked sum-exp path.
    nOut = 32
    nClasses = 48
    batch = 16

    key = jax.random.PRNGKey(0)
    kx, kw, kl = jax.random.split(key, 3)

    x = jax.random.normal(kx, (batch, nOut), dtype=jnp.float32)
    label = jax.random.randint(kl, (batch,), 0, nClasses, dtype=jnp.int32)
    # xavier_normal_ with gain=1 -> std = sqrt(2 / (fan_in + fan_out))
    std = math.sqrt(2.0 / (nClasses + nOut))
    weight = jax.random.normal(kw, (nClasses, nOut), dtype=jnp.float32) * std

    loss = aamsoftmax_loss(x, weight, label, margin=0.3, scale=15.0,
                           easy_margin=False)
    loss = jax.block_until_ready(loss)

    loss_ref = aamsoftmax_loss_ref(x, weight, label, margin=0.3, scale=15.0,
                                   easy_margin=False)
    assert jnp.allclose(loss, loss_ref, rtol=1e-4, atol=1e-4), (loss, loss_ref)

    print("KERNEL_OK")
</pallas_src>

<mosaic_0001>
module attributes {stable_mosaic.version = 11 : i64} {
  func.func @aamsoftmax_kernel(%arg0: i32, %arg1: i32, %arg2: memref<16x32xf32, #tpu.memory_space<vmem>>, %arg3: memref<32x128xf32, #tpu.memory_space<vmem>>, %arg4: memref<16x1xi32, #tpu.memory_space<vmem>>, %arg5: memref<16x1xf32, #tpu.memory_space<vmem>>, %arg6: memref<16x32xf32, #tpu.memory_space<vmem>>, %arg7: memref<16x1xf32, #tpu.memory_space<vmem>>, %arg8: memref<16x1xf32, #tpu.memory_space<vmem>>) attributes {dimension_semantics = [#tpu.dimension_semantics<parallel>, #tpu.dimension_semantics<arbitrary>], iteration_bounds = array<i64: 1, 1>, scalar_prefetch = 0 : i64, scratch_operands = 3 : i64, tpu.core_type = #tpu.core_type<tc>, window_params = [{transform_indices = @transform_0, window_bounds = array<i64: 16, 32>}, {transform_indices = @transform_1, window_bounds = array<i64: 32, 128>}, {transform_indices = @transform_2, window_bounds = array<i64: 16, 1>}, {transform_indices = @transform_3, window_bounds = array<i64: 16, 1>}]} {
    %c0_i32 = arith.constant 0 : i32
    %0 = arith.cmpi eq, %arg1, %c0_i32 : i32
    %1 = arith.extui %0 : i1 to i32
    %c0_i32_0 = arith.constant 0 : i32
    %2 = arith.cmpi ne, %1, %c0_i32_0 : i32
    scf.if %2 {
      %c0_21 = arith.constant 0 : index
      %c0_22 = arith.constant 0 : index
      %35 = vector.load %arg2[%c0_21, %c0_22] : memref<16x32xf32, #tpu.memory_space<vmem>>, vector<16x32xf32>
      %36 = arith.mulf %35, %35 : vector<16x32xf32>
      %cst_23 = arith.constant dense<0.000000e+00> : vector<16xf32>
      %37 = vector.multi_reduction <add>, %36, %cst_23 [1] : vector<16x32xf32> to vector<16xf32>
      %38 = vector.shape_cast %37 : vector<16xf32> to vector<16x1xf32>
      %cst_24 = arith.constant 1.000000e-24 : f32
      %39 = vector.broadcast %cst_24 : f32 to vector<16x1xf32>
      %40 = arith.maximumf %38, %39 : vector<16x1xf32>
      %41 = math.rsqrt %40 : vector<16x1xf32>
      %cst_25 = arith.constant 1.500000e+01 : f32
      %42 = vector.broadcast %cst_25 : f32 to vector<16x1xf32>
      %43 = arith.mulf %41, %42 : vector<16x1xf32>
      %44 = vector.broadcast %43 : vector<16x1xf32> to vector<16x32xf32>
      %45 = arith.mulf %35, %44 : vector<16x32xf32>
      %c0_26 = arith.constant 0 : index
      %c0_27 = arith.constant 0 : index
      %46 = vector.load %arg6[%c0_26, %c0_27] : memref<16x32xf32, #tpu.memory_space<vmem>>, vector<16x32xf32>
      tpu.vector_store %arg6[%c0_26, %c0_27], %45 {strides = array<i32>} : memref<16x32xf32, #tpu.memory_space<vmem>>, vector<16x32xf32>,
      %cst_28 = arith.constant 0.000000e+00 : f32
      %47 = vector.broadcast %cst_28 : f32 to vector<16x1xf32>
      %c0_29 = arith.constant 0 : index
      %c0_30 = arith.constant 0 : index
      %48 = vector.load %arg7[%c0_29, %c0_30] : memref<16x1xf32, #tpu.memory_space<vmem>>, vector<16x1xf32>
      tpu.vector_store %arg7[%c0_29, %c0_30], %47 {strides = array<i32>} : memref<16x1xf32, #tpu.memory_space<vmem>>, vector<16x1xf32>,
      %cst_31 = arith.constant 0.000000e+00 : f32
      %49 = vector.broadcast %cst_31 : f32 to vector<16x1xf32>
      %c0_32 = arith.constant 0 : index
      %c0_33 = arith.constant 0 : index
      %50 = vector.load %arg8[%c0_32, %c0_33] : memref<16x1xf32, #tpu.memory_space<vmem>>, vector<16x1xf32>
      tpu.vector_store %arg8[%c0_32, %c0_33], %49 {strides = array<i32>} : memref<16x1xf32, #tpu.memory_space<vmem>>, vector<16x1xf32>,
    } else {
    }
    %c0 = arith.constant 0 : index
    %c0_1 = arith.constant 0 : index
    %3 = vector.load %arg6[%c0, %c0_1] : memref<16x32xf32, #tpu.memory_space<vmem>>, vector<16x32xf32>
    %c0_2 = arith.constant 0 : index
    %c0_3 = arith.constant 0 : index
    %4 = vector.load %arg3[%c0_2, %c0_3] : memref<32x128xf32, #tpu.memory_space<vmem>>, vector<32x128xf32>
    %cst = arith.constant dense<0.000000e+00> : vector<16x128xf32>
    %5 = tpu.matmul %3, %4, %cst {dimension_numbers = #tpu.dot_dimension_numbers<[1], [0], [0], [1], [0, 0, 1, 1], [], []>} : vector<16x32xf32>, vector<32x128xf32>, vector<16x128xf32> -> vector<16x128xf32>
    %c128_i32 = arith.constant 128 : i32
    %6 = arith.muli %arg1, %c128_i32 : i32
    %7 = tpu.iota {dimensions = array<i32: 1>} : vector<16x128xi32>
    %8 = vector.broadcast %6 : i32 to vector<16x128xi32>
    %9 = arith.addi %8, %7 : vector<16x128xi32>
    %cst_4 = arith.constant 1.500000e+01 : f32
    %10 = vector.broadcast %cst_4 : f32 to vector<16x128xf32>
    %11 = arith.subf %5, %10 : vector<16x128xf32>
    %12 = math.exp %11 : vector<16x128xf32>
    %c48_i32 = arith.constant 48 : i32
    %13 = vector.broadcast %c48_i32 : i32 to vector<16x128xi32>
    %14 = arith.cmpi slt, %9, %13 : vector<16x128xi32>
    %cst_5 = arith.constant 0.000000e+00 : f32
    %15 = vector.broadcast %cst_5 : f32 to vector<16x128xf32>
    %16 = arith.select %14, %12, %15 : vector<16x128xi1>, vector<16x128xf32>
    %c0_6 = arith.constant 0 : index
    %c0_7 = arith.constant 0 : index
    %17 = vector.load %arg7[%c0_6, %c0_7] : memref<16x1xf32, #tpu.memory_space<vmem>>, vector<16x1xf32>
    %cst_8 = arith.constant dense<0.000000e+00> : vector<16xf32>
    %18 = vector.multi_reduction <add>, %16, %cst_8 [1] : vector<16x128xf32> to vector<16xf32>
    %19 = vector.shape_cast %18 : vector<16xf32> to vector<16x1xf32>
    %20 = arith.addf %17, %19 : vector<16x1xf32>
    %c0_9 = arith.constant 0 : index
    %c0_10 = arith.constant 0 : index
    %21 = vector.load %arg7[%c0_9, %c0_10] : memref<16x1xf32, #tpu.memory_space<vmem>>, vector<16x1xf32>
    tpu.vector_store %arg7[%c0_9, %c0_10], %20 {strides = array<i32>} : memref<16x1xf32, #tpu.memory_space<vmem>>, vector<16x1xf32>,
    %c0_11 = arith.constant 0 : index
    %c0_12 = arith.constant 0 : index
    %22 = vector.load %arg4[%c0_11, %c0_12] : memref<16x1xi32, #tpu.memory_space<vmem>>, vector<16x1xi32>
    %23 = vector.broadcast %22 : vector<16x1xi32> to vector<16x128xi32>
    %24 = arith.cmpi eq, %9, %23 : vector<16x128xi32>
    %c0_13 = arith.constant 0 : index
    %c0_14 = arith.constant 0 : index
    %25 = vector.load %arg8[%c0_13, %c0_14] : memref<16x1xf32, #tpu.memory_space<vmem>>, vector<16x1xf32>
    %cst_15 = arith.constant 0.000000e+00 : f32
    %26 = vector.broadcast %cst_15 : f32 to vector<16x128xf32>
    %27 = arith.select %24, %5, %26 : vector<16x128xi1>, vector<16x128xf32>
    %cst_16 = arith.constant dense<0.000000e+00> : vector<16xf32>
    %28 = vector.multi_reduction <add>, %27, %cst_16 [1] : vector<16x128xf32> to vector<16xf32>
    %29 = vector.shape_cast %28 : vector<16xf32> to vector<16x1xf32>
    %30 = arith.addf %25, %29 : vector<16x1xf32>
    %c0_17 = arith.constant 0 : index
    %c0_18 = arith.constant 0 : index
    %31 = vector.load %arg8[%c0_17, %c0_18] : memref<16x1xf32, #tpu.memory_space<vmem>>, vector<16x1xf32>
    tpu.vector_store %arg8[%c0_17, %c0_18], %30 {strides = array<i32>} : memref<16x1xf32, #tpu.memory_space<vmem>>, vector<16x1xf32>,
    %c0_i32_19 = arith.constant 0 : i32
    %32 = arith.cmpi eq, %arg1, %c0_i32_19 : i32
    %33 = arith.extui %32 : i1 to i32
    %c0_i32_20 = arith.constant 0 : i32
    %34 = arith.cmpi ne, %33, %c0_i32_20 : i32
    scf.if %34 {
      %c0_21 = arith.constant 0 : index
      %c0_22 = arith.constant 0 : index
      %35 = vector.load %arg8[%c0_21, %c0_22] : memref<16x1xf32, #tpu.memory_space<vmem>>, vector<16x1xf32>
      %cst_23 = arith.constant 0.0666666701 : f32
      %36 = vector.broadcast %cst_23 : f32 to vector<16x1xf32>
      %37 = arith.mulf %35, %36 : vector<16x1xf32>
      %38 = arith.mulf %37, %37 : vector<16x1xf32>
      %cst_24 = arith.constant 1.000000e+00 : f32
      %39 = vector.broadcast %cst_24 : f32 to vector<16x1xf32>
      %40 = arith.subf %39, %38 : vector<16x1xf32>
      %cst_25 = arith.constant 0.000000e+00 : f32
      %cst_26 = arith.constant 1.000000e+00 : f32
      %41 = vector.broadcast %cst_25 : f32 to vector<16x1xf32>
      %42 = arith.maximumf %41, %40 : vector<16x1xf32>
      %43 = vector.broadcast %cst_26 : f32 to vector<16x1xf32>
      %44 = arith.minimumf %43, %42 : vector<16x1xf32>
      %45 = math.sqrt %44 : vector<16x1xf32>
      %cst_27 = arith.constant 0.955336511 : f32
      %46 = vector.broadcast %cst_27 : f32 to vector<16x1xf32>
      %47 = arith.mulf %37, %46 : vector<16x1xf32>
      %cst_28 = arith.constant 0.295520216 : f32
      %48 = vector.broadcast %cst_28 : f32 to vector<16x1xf32>
      %49 = arith.mulf %45, %48 : vector<16x1xf32>
      %50 = arith.subf %47, %49 : vector<16x1xf32>
      %cst_29 = arith.constant -0.955336511 : f32
      %51 = vector.broadcast %cst_29 : f32 to vector<16x1xf32>
      %52 = arith.subf %37, %51 : vector<16x1xf32>
      %cst_30 = arith.constant 0.000000e+00 : f32
      %53 = vector.broadcast %cst_30 : f32 to vector<16x1xf32>
      %54 = arith.cmpf ogt, %52, %53 : vector<16x1xf32>
      %cst_31 = arith.constant 0.0886560603 : f32
      %55 = vector.broadcast %cst_31 : f32 to vector<16x1xf32>
      %56 = arith.subf %37, %55 : vector<16x1xf32>
      %57 = arith.select %54, %50, %56 : vector<16x1xi1>, vector<16x1xf32>
      %cst_32 = arith.constant 1.500000e+01 : f32
      %58 = vector.broadcast %cst_32 : f32 to vector<16x1xf32>
      %59 = arith.mulf %58, %57 : vector<16x1xf32>
      %c0_33 = arith.constant 0 : index
      %c0_34 = arith.constant 0 : index
      %60 = vector.load %arg7[%c0_33, %c0_34] : memref<16x1xf32, #tpu.memory_space<vmem>>, vector<16x1xf32>
      %cst_35 = arith.constant 1.500000e+01 : f32
      %61 = vector.broadcast %cst_35 : f32 to vector<16x1xf32>
      %62 = arith.subf %35, %61 : vector<16x1xf32>
      %63 = math.exp %62 : vector<16x1xf32>
      %64 = arith.subf %60, %63 : vector<16x1xf32>
      %cst_36 = arith.constant 1.500000e+01 : f32
      %65 = vector.broadcast %cst_36 : f32 to vector<16x1xf32>
      %66 = arith.subf %59, %65 : vector<16x1xf32>
      %67 = math.exp %66 : vector<16x1xf32>
      %68 = arith.addf %64, %67 : vector<16x1xf32>
      %cst_37 = arith.constant 1.000000e-30 : f32
      %69 = vector.broadcast %cst_37 : f32 to vector<16x1xf32>
      %70 = arith.maximumf %68, %69 : vector<16x1xf32>
      %71 = math.log %70 : vector<16x1xf32>
      %cst_38 = arith.constant 1.500000e+01 : f32
      %72 = vector.broadcast %cst_38 : f32 to vector<16x1xf32>
      %73 = arith.addf %72, %71 : vector<16x1xf32>
      %74 = arith.subf %73, %59 : vector<16x1xf32>
      %c0_39 = arith.constant 0 : index
      %c0_40 = arith.constant 0 : index
      %75 = vector.load %arg5[%c0_39, %c0_40] : memref<16x1xf32, #tpu.memory_space<vmem>>, vector<16x1xf32>
      tpu.vector_store %arg5[%c0_39, %c0_40], %74 {strides = array<i32>} : memref<16x1xf32, #tpu.memory_space<vmem>>, vector<16x1xf32>,
    } else {
    }
    return
  }
  func.func @transform_0(%arg0: i32, %arg1: i32) -> (i32, i32) {
    %c0_i32 = arith.constant 0 : i32
    %c0_i32_0 = arith.constant 0 : i32
    return %arg0, %c0_i32 : i32, i32
  }
  func.func @transform_1(%arg0: i32, %arg1: i32) -> (i32, i32) {
    %c0_i32 = arith.constant 0 : i32
    %c0_i32_0 = arith.constant 0 : i32
    return %c0_i32, %arg1 : i32, i32
  }
  func.func @transform_2(%arg0: i32, %arg1: i32) -> (i32, i32) {
    %c0_i32 = arith.constant 0 : i32
    %c0_i32_0 = arith.constant 0 : i32
    return %arg0, %c0_i32 : i32, i32
  }
  func.func @transform_3(%arg0: i32, %arg1: i32) -> (i32, i32) {
    %c0_i32 = arith.constant 0 : i32
    %c0_i32_0 = arith.constant 0 : i32
    return %arg0, %c0_i32 : i32, i32
  }
}

</mosaic_0001>

<llo_original>
// kernel: tpu_custom_call.1
$region0: #{tpu_custom_call.1}
  #allocation0 [shape = 'u32[]', space=smem, size = 0x4, offset = 0x4, fixed_abs, tag = 'smem constant byte address 0x4 - core index']
  #allocation1 [shape = 'u32[144,128]{1,0:T(1,128)}', space=vmem, size = 0x12000, scoped, tag = 'internal scratch']
  #allocation2 [shape = 'f32[16,32]{1,0:T(8,128)}', space=vmem, size = 0x2000, scoped, tag = 'scratch operand']
  #allocation3 [shape = 'f32[16,1]{1,0:T(8,128)}', space=vmem, size = 0x2000, scoped, tag = 'scratch operand']
  #allocation4 [shape = 'f32[16,1]{1,0:T(8,128)}', space=vmem, size = 0x2000, scoped, tag = 'scratch operand']
  %s0 = inlined_call_operand.vmem [shape: f32[16,32], index: 0, kind: input, shape index: {}]
  %s1 = inlined_call_operand.hbm [shape: f32[32,128], index: 1, kind: input, shape index: {}]
  %s2 = inlined_call_operand.vmem [shape: s32[16,1], index: 2, kind: input, shape index: {}]
  %s3 = inlined_call_operand.vmem [shape: f32[16,1], index: 3, kind: output, shape index: {}]
  %s4 = sld [smem:[#allocation0]]
  $region34: #{tpu_custom_call.1} parent=0
    _
  %s6 = ssub.s32 1, %s4
  %s7 = scalar_select 0, %s6, %s4
  $region1: #{tpu_custom_call.1} parent=0
    #allocation5 [shape = 'u8[16384]{0}', space=vmem, size = 0x4000, scoped, tag = 'input window, operand 1, single buffered']
    #allocation6 [shape = 's32[1]{0}', space=sflag, size = 0x4, scoped, tag = 'scoped memory for tpu_custom_call.1']
    %8 = vsyncpa [#allocation6], 0
    // Predicated region
    $region2: #{tpu_custom_call.1} parent=1 // pred_check
      _
    $region3: #{tpu_custom_call.1} parent=1 // pred_check_branch
      %10 = sbr.rel (0) target = $region5
    $region4: #{tpu_custom_call.1} parent=1 // pred_region
      _
    $region5: #{tpu_custom_call.1} parent=1 // pred_fallthru
      _
    // Predicated region
    $region6: #{tpu_custom_call.1} parent=1 // pred_check
      _
    $region7: #{tpu_custom_call.1} parent=1 // pred_check_branch
      %12 = sbr.rel (0) target = $region9
    $region8: #{tpu_custom_call.1} parent=1 // pred_region
      %s14 = ssub.s32 512, 512
      %15 = vsyncadd [#allocation6], %s14
      %s16 = sshll.u32 [#allocation5], 4
      %s17 = int_to_ptr.vmem [resolvable:$true] %s16
      %22 = dma.hbm_to_vmem [thread:$0]  %s1, 512, %s17, [#allocation6], 128, 128, 8
    $region9: #{tpu_custom_call.1} parent=1 // pred_fallthru
      _
    // Predicated region
    $region10: #{tpu_custom_call.1} parent=1 // pred_check
      _
    $region11: #{tpu_custom_call.1} parent=1 // pred_check_branch
      %24 = sbr.rel (0) target = $region13
    $region12: #{tpu_custom_call.1} parent=1 // pred_region
      _
    $region13: #{tpu_custom_call.1} parent=1 // pred_fallthru
      _
    // Predicated region
    $region14: #{tpu_custom_call.1} parent=1 // pred_check
      _
    $region15: #{tpu_custom_call.1} parent=1 // pred_check_branch
      %26 = sbr.rel (0) target = $region17
    $region16: #{tpu_custom_call.1} parent=1 // pred_region
      %27 = dma.done [#allocation6], 512
    $region17: #{tpu_custom_call.1} parent=1 // pred_fallthru
      _
    %p28 = scmp.eq.s32.totalorder 0, 0
    // Predicated region
    $region18: #{tpu_custom_call.1} parent=1 // pred_check
      %p29 = pneg %p28
    $region19: #{tpu_custom_call.1} parent=1 // pred_check_branch
      %31 = sbr.rel (%p29) target = $region21
    $region20: #{tpu_custom_call.1} parent=1 // pred_region
      %v32 = vld [vmem:[%s0] sm:$0xff]
      %v33 = vld [vmem:[%s0 + $0x8] sm:$0xff]
      %v34 = vmul.f32 %v32, %v32
      %v35 = vmul.f32 %v33, %v33
      %vm36 = vcmask 261120
      %v37 = vsel %vm36, %v34, 0.0
      %38 = vadd.xlane.f32.xlu0 %v37
      %v39 = vpop.xlane.xlu0 %38
      %v40 = vsel %vm36, %v35, 0.0
      %41 = vadd.xlane.f32.xlu0 %v40
      %v42 = vpop.xlane.xlu0 %41
      %v43 = vmax.f32 %v39, 1e-24
      %v44 = vmax.f32 %v42, 1e-24
      %v45 = vrsqrt.pop %v43
      %v46 = vrsqrt.pop %v44
      %v47 = vmul.f32 %v45, 15.0
      %v48 = vmul.f32 %v46, 15.0
      %v49 = vmul.f32 %v32, %v47
      %v50 = vmul.f32 %v33, %v48
      %51 = vst.msk [vmem:[#allocation2] sm:$0xff] %vm36, %v49
      %52 = vst.msk [vmem:[#allocation2 + $0x8] sm:$0xff] %vm36, %v50
      %vm53 = vcmask 7168
      %54 = vst.msk [vmem:[#allocation3] sm:$0xff] %vm53, 0.0
      %55 = vst.msk [vmem:[#allocation3 + $0x8] sm:$0xff] %vm53, 0.0
      %56 = vst.msk [vmem:[#allocation4] sm:$0xff] %vm53, 0.0
      %57 = vst.msk [vmem:[#allocation4 + $0x8] sm:$0xff] %vm53, 0.0
    $region21: #{tpu_custom_call.1} parent=1 // pred_fallthru
      _
    %v58 = vld [vmem:[#allocation2] sm:$0xff]
    %v59 = vld [vmem:[#allocation2 + $0x8] sm:$0xff]
    %v60 = vld [vmem:[#allocation5] sm:$0xff]
    %v61 = vld [vmem:[#allocation5 + $0x8] sm:$0xff]
    %v62 = vld [vmem:[#allocation5 + $0x10] sm:$0xff]
    %v63 = vld [vmem:[#allocation5 + $0x18] sm:$0xff]
    %vm64 = vcmask 261120
    %v66 = vsel %vm64, %v58, 0
    %v69 = vsel %vm64, %v59, 0
    %71 = vmatprep.subr.mxu0 0.0
    %72 = vmatpush1.msra.mxu0 %v60
    %73 = vmatprep.subr.mxu0 0.0
    %74 = vmatpush1.msra.mxu0 %v61
    %75 = vmatprep.subr.mxu0 0.0
    %76 = vmatpush1.msra.mxu0 %v62
    %77 = vmatprep.subr.mxu0 0.0
    %78 = vmatpush1.msra.mxu0 %v63
    %79 = vmatprep.subr.mxu0 0.0
    %80 = vmatpush1.msra.mxu0 0.0
    %81 = vmatprep.subr.mxu0 0.0
    %82 = vmatpush1.msra.mxu0 0.0
    %83 = vmatprep.subr.mxu0 0.0
    %84 = vmatpush1.msra.mxu0 0.0
    %85 = vmatprep.subr.mxu0 0.0
    %86 = vmatpush1.msra.mxu0 0.0
    %87 = vmatprep.subr.mxu0 0.0
    %88 = vmatpush1.msra.mxu0 0.0
    %89 = vmatprep.subr.mxu0 0.0
    %90 = vmatpush1.msra.mxu0 0.0
    %91 = vmatprep.subr.mxu0 0.0
    %92 = vmatpush1.msra.mxu0 0.0
    %93 = vmatprep.subr.mxu0 0.0
    %94 = vmatpush1.msra.mxu0 0.0
    %95 = vmatprep.subr.mxu0 0.0
    %96 = vmatpush1.msra.mxu0 0.0
    %97 = vmatprep.subr.mxu0 0.0
    %98 = vmatpush1.msra.mxu0 0.0
    %99 = vmatprep.subr.mxu0 0.0
    %100 = vmatpush1.msra.mxu0 0.0
    %101 = vmatprep.subr.mxu0 0.0
    %102 = vmatpush1.msra.mxu0 0.0
    %103 = vmatprep.subr.mxu0 0.0
    %104 = vmatpush1.msra.mxu0 0.0
    %105 = vmatprep.subr.mxu0 0.0
    %106 = vmatpush1.msra.mxu0 0.0
    %107 = vmatprep.subr.mxu0 0.0
    %108 = vmatpush1.msra.mxu0 0.0
    %109 = vmatprep.subr.mxu0 0.0
    %110 = vmatpush1.msra.mxu0 0.0
    %111 = vmatprep.subr.mxu0 0.0
    %112 = vmatpush1.msra.mxu0 0.0
    %113 = vmatprep.subr.mxu0 0.0
    %114 = vmatpush1.msra.mxu0 0.0
    %115 = vmatprep.subr.mxu0 0.0
    %116 = vmatpush1.msra.mxu0 0.0
    %117 = vmatprep.subr.mxu0 0.0
    %118 = vmatpush1.msra.mxu0 0.0
    %119 = vmatprep.subr.mxu0 0.0
    %120 = vmatpush1.msra.mxu0 0.0
    %121 = vmatprep.subr.mxu0 0.0
    %122 = vmatpush1.msra.mxu0 0.0
    %123 = vmatprep.subr.mxu0 0.0
    %124 = vmatpush1.msra.mxu0 0.0
    %125 = vmatprep.subr.mxu0 0.0
    %126 = vmatpush1.msra.mxu0 0.0
    %127 = vmatprep.subr.mxu0 0.0
    %128 = vmatpush1.msra.mxu0 0.0
    %129 = vmatprep.subr.mxu0 0.0
    %130 = vmatpush1.msra.mxu0 0.0
    %131 = vmatprep.subr.mxu0 0.0
    %132 = vmatpush1.msra.mxu0 0.0
    %133 = vmatprep.subr.mxu0 0.0
    %134 = vmatpush1.msra.mxu0 0.0
    %135 = vmatprep.mubr.f32.mxu0 0.0
    %136 = vmatmul.mubr.f32.gmra.mrb[0].mxu0 %v66
    %v137 = vpop.f32.mrb[0].mxu0
    %v138 = vadd.f32 0.0, %v137
    %v139 = vpop.f32.mrb[0].mxu0
    %140 = vmatprep.mubr.f32.mxu0 0.0
    %141 = vmatmul.mubr.f32.gmra.mrb[0].mxu0 %v69
    %v142 = vpop.f32.mrb[0].mxu0
    %v143 = vadd.f32 0.0, %v142
    %v144 = vpop.f32.mrb[0].mxu0
    %145 = vdwg.mxu0
    %s146 = smul.u32 0, 128
    %v147 = vlaneseq
    %v148 = vand.u32 %v147, 127
    %v149 = vstv %s146
    %v150 = vadd.s32 %v149, %v148
    %v151 = vsub.f32 %v138, 15.0
    %v152 = vsub.f32 %v143, 15.0
    %v153 = vmul.f32 %v151, 1.442695
    %v154 = vpow.pop %v153
    %v155 = vmul.f32 %v152, 1.442695
    %v156 = vpow.pop %v155
    %vm157 = vcmp.lt.s32.totalorder %v150, 48
    %v158 = vsel %vm157, %v154, 0.0
    %v159 = vsel %vm157, %v156, 0.0
    %v160 = vld [vmem:[#allocation3] sm:$0xff]
    %v161 = vld [vmem:[#allocation3 + $0x8] sm:$0xff]
    %162 = vadd.xlane.f32.xlu0 %v158
    %v163 = vpop.xlane.xlu0 %162
    %164 = vadd.xlane.f32.xlu0 %v159
    %v165 = vpop.xlane.xlu0 %164
    %v166 = vadd.f32 %v160, %v163
    %v167 = vadd.f32 %v161, %v165
    %vm168 = vcmask 7168
    %169 = vst.msk [vmem:[#allocation3] sm:$0xff] %vm168, %v166
    %170 = vst.msk [vmem:[#allocation3 + $0x8] sm:$0xff] %vm168, %v167
    %v171 = vld [vmem:[%s2] sm:$0xff]
    %v172 = vld [vmem:[%s2 + $0x8] sm:$0xff]
    %173 = vset.pattern.permute.xlu0 0
    %174 = vperm.xlu0 %173, %v171
    %v175 = vpop.permute.xlu0 %174
    %176 = vset.pattern.permute.xlu0 0
    %177 = vperm.xlu0 %176, %v172
    %v178 = vpop.permute.xlu0 %177
    %vm179 = vcmp.eq.s32.totalorder %v150, %v175
    %vm180 = vcmp.eq.s32.totalorder %v150, %v178
    %v181 = vld [vmem:[#allocation4] sm:$0xff]
    %v182 = vld [vmem:[#allocation4 + $0x8] sm:$0xff]
    %v183 = vsel %vm179, %v138, 0.0
    %v184 = vsel %vm180, %v143, 0.0
    %185 = vadd.xlane.f32.xlu0 %v183
    %v186 = vpop.xlane.xlu0 %185
    %187 = vadd.xlane.f32.xlu0 %v184
    %v188 = vpop.xlane.xlu0 %187
    %v189 = vadd.f32 %v181, %v186
    %v190 = vadd.f32 %v182, %v188
    %191 = vst.msk [vmem:[#allocation4] sm:$0xff] %vm168, %v189
    %192 = vst.msk [vmem:[#allocation4 + $0x8] sm:$0xff] %vm168, %v190
    // Predicated region
    $region22: #{tpu_custom_call.1} parent=1 // pred_check
      %p193 = pneg %p28
    $region23: #{tpu_custom_call.1} parent=1 // pred_check_branch
      %195 = sbr.rel (%p193) target = $region25
    $region24: #{tpu_custom_call.1} parent=1 // pred_region
      %v196 = vld [vmem:[#allocation4] sm:$0xff]
      %v197 = vld [vmem:[#allocation4 + $0x8] sm:$0xff]
      %v198 = vmul.f32 %v196, 0.06666667
      %v199 = vmul.f32 %v197, 0.06666667
      %v200 = vmul.f32 %v198, %v198
      %v201 = vmul.f32 %v199, %v199
      %v202 = vsub.f32 1.0, %v200
      %v203 = vsub.f32 1.0, %v201
      %v204 = vmax.f32 %v202, 0.0
      %v205 = vmax.f32 %v203, 0.0
      %v206 = vmin.f32 %v204, 1.0
      %v207 = vmin.f32 %v205, 1.0
      %v208 = vrsqrt.pop %v206
      %v209 = vmul.f32 %v206, %v208
      %vm210 = vcmp.eq.f32.partialorder %v206, inf
      %v211 = vsel %vm210, %v206, %v209
      %vm212 = vcmp.eq.f32.partialorder %v206, 0.0
      %v213 = vand.u32 %v206, 2147483648
      %v214 = vsel %vm212, %v213, %v211
      %v215 = vrsqrt.pop %v207
      %v216 = vmul.f32 %v207, %v215
      %vm217 = vcmp.eq.f32.partialorder %v207, inf
      %v218 = vsel %vm217, %v207, %v216
      %vm219 = vcmp.eq.f32.partialorder %v207, 0.0
      %v220 = vand.u32 %v207, 2147483648
      %v221 = vsel %vm219, %v220, %v218
      %v222 = vmul.f32 %v198, 0.9553365
      %v223 = vmul.f32 %v199, 0.9553365
      %v224 = vmul.f32 %v214, 0.29552022
      %v225 = vmul.f32 %v221, 0.29552022
      %v226 = vsub.f32 %v222, %v224
      %v227 = vsub.f32 %v223, %v225
      %v228 = vsub.f32 %v198, -0.9553365
      %v229 = vsub.f32 %v199, -0.9553365
      %vm230 = vcmp.gt.f32.partialorder %v228, 0.0
      %vm231 = vcmp.gt.f32.partialorder %v229, 0.0
      %v232 = vsub.f32 %v198, 0.08865606
      %v233 = vsub.f32 %v199, 0.08865606
      %v234 = vsel %vm230, %v226, %v232
      %v235 = vsel %vm231, %v227, %v233
      %v236 = vmul.f32 %v234, 15.0
      %v237 = vmul.f32 %v235, 15.0
      %v238 = vld [vmem:[#allocation3] sm:$0xff]
      %v239 = vld [vmem:[#allocation3 + $0x8] sm:$0xff]
      %v240 = vsub.f32 %v196, 15.0
      %v241 = vsub.f32 %v197, 15.0
      %v242 = vmul.f32 %v240, 1.442695
      %v243 = vpow.pop %v242
      %v244 = vmul.f32 %v241, 1.442695
      %v245 = vpow.pop %v244
      %v246 = vsub.f32 %v238, %v243
      %v247 = vsub.f32 %v239, %v245
      %v248 = vsub.f32 %v236, 15.0
      %v249 = vsub.f32 %v237, 15.0
      %v250 = vmul.f32 %v248, 1.442695
      %v251 = vpow.pop %v250
      %v252 = vmul.f32 %v249, 1.442695
      %v253 = vpow.pop %v252
      %v254 = vadd.f32 %v246, %v251
      %v255 = vadd.f32 %v247, %v253
      %v256 = vmax.f32 %v254, 1e-30
      %v257 = vmax.f32 %v255, 1e-30
      %v258 = vlog2.pop %v256
      %v259 = vmul.f32 %v258, 0.6931472
      %v260 = vlog2.pop %v257
      %v261 = vmul.f32 %v260, 0.6931472
      %v262 = vadd.f32 %v259, 15.0
      %v263 = vadd.f32 %v261, 15.0
      %v264 = vsub.f32 %v262, %v236
      %v265 = vsub.f32 %v263, %v237
      %266 = vst.msk [vmem:[%s3] sm:$0xff] %vm168, %v264
      %267 = vst.msk [vmem:[%s3 + $0x8] sm:$0xff] %vm168, %v265
    $region25: #{tpu_custom_call.1} parent=1 // pred_fallthru
      _
    // Predicated region
    $region26: #{tpu_custom_call.1} parent=1 // pred_check
      _
    $region27: #{tpu_custom_call.1} parent=1 // pred_check_branch
      %269 = sbr.rel (0) target = $region29
    $region28: #{tpu_custom_call.1} parent=1 // pred_region
      _
    $region29: #{tpu_custom_call.1} parent=1 // pred_fallthru
      _
    // Predicated region
    $region30: #{tpu_custom_call.1} parent=1 // pred_check
      _
    $region31: #{tpu_custom_call.1} parent=1 // pred_check_branch
      %271 = sbr.rel (0) target = $region33
    $region32: #{tpu_custom_call.1} parent=1 // pred_region
      _
    $region33: #{tpu_custom_call.1} parent=1 // pred_fallthru
      _
    %272 = vsyncpa [#allocation6], 1

</llo_original>
